<compile_context>
chip_gen: v5e
topology: v5e:2x2
jax: 0.10.0
libtpu: 0.0.40
codegen_flags: <defaults>
</compile_context>

<pallas_src>
import jax
import jax.numpy as jnp
from jax.experimental import pallas as pl
from jax.experimental.pallas import tpu as pltpu

EPS = 1e-5


def _fusion_bn_kernel(img_ref, aud_ref, p_ref, o_ref):
    # img_ref/aud_ref: (B, F) f32 in VMEM.
    # p_ref: (1, 5F) f32 packed params = [g0 (F) | g1 (2F) | b1 (2F)].
    # o_ref: (B, 2F) f32 — concatenated, double-batchnormed output.
    F = img_ref.shape[1]

    # Static slices of the packed parameter tile (zero runtime cost).
    g0 = p_ref[:, 0:F]                 # norm0 gamma          (1, F)
    g1 = p_ref[:, F:3 * F]             # norm  gamma          (1, 2F)
    b1 = p_ref[:, 3 * F:5 * F]         # norm  beta           (1, 2F)
    g0sq_eps = g0 * g0 + EPS           # hoisted, shared by both halves

    def fused_double_bn(x, g1_half, b1_half):
        # One stats pass + one apply pass for BN1024 followed by (this
        # half's slice of) BN2048.  Exact in real arithmetic:
        #   mean_batch(BN0(x)) == b0          (cancels inside BN1)
        #   var_batch (BN0(x)) == g0^2 * var0 / (var0 + eps)
        #   => scale = g1*g0*rsqrt(var0+eps)*rsqrt(g0^2*var0/(var0+eps)+eps)
        #            = g1*g0*rsqrt((g0^2+eps)*var0 + eps^2)     (single rsqrt)
        mean0 = jnp.mean(x, axis=0, keepdims=True)              # (1, F)
        d = x - mean0                                           # reused below
        var0 = jnp.mean(d * d, axis=0, keepdims=True)           # biased (train) var
        scale = g1_half * g0 * jax.lax.rsqrt(g0sq_eps * var0 + EPS * EPS)
        return d * scale + b1_half

    # Write the concatenated layout directly: image half then audio half.
    o_ref[:, :F] = fused_double_bn(img_ref[...], g1[:, :F], b1[:, :F])
    o_ref[:, F:] = fused_double_bn(aud_ref[...], g1[:, F:], b1[:, F:])


def fusion_model_forward(image_features, audio_features, params):
    """image_features, audio_features: [B, 1024] f32 -> [B, 2048] f32."""
    B, F = image_features.shape
    assert audio_features.shape == (B, F)

    # Single packed parameter array: [g0 | g1 | b1], shape (1, 5F).
    # (norm0_bias cancels exactly in the fused math and is not needed.)
    packed = jnp.concatenate(
        [params["norm0_weight"].reshape(-1),
         params["norm_weight"].reshape(-1),
         params["norm_bias"].reshape(-1)]).reshape(1, 5 * F).astype(jnp.float32)

    # No grid: one kernel invocation, whole arrays resident in VMEM once
    # (single-buffered — no pipeline double buffers for a 1-step kernel).
    return pl.pallas_call(
        _fusion_bn_kernel,
        out_shape=jax.ShapeDtypeStruct((B, 2 * F), jnp.float32),
        in_specs=[
            pl.BlockSpec(memory_space=pltpu.MemorySpace.VMEM),  # image features
            pl.BlockSpec(memory_space=pltpu.MemorySpace.VMEM),  # audio features
            pl.BlockSpec(memory_space=pltpu.MemorySpace.VMEM),  # packed params
        ],
        out_specs=pl.BlockSpec(memory_space=pltpu.MemorySpace.VMEM),
    )(image_features, audio_features, packed)


def init_params():
    # PyTorch BatchNorm1d default init: weight = 1, bias = 0.
    return {
        "norm0_weight": jnp.ones((1024,), jnp.float32),
        "norm0_bias": jnp.zeros((1024,), jnp.float32),
        "norm_weight": jnp.ones((2048,), jnp.float32),
        "norm_bias": jnp.zeros((2048,), jnp.float32),
    }


def _reference(image_features, audio_features, params):
    # Faithful two-pass reference (matches the PyTorch train-mode forward).
    def bn(x, g, b):
        m = jnp.mean(x, axis=0, keepdims=True)
        v = jnp.mean((x - m) ** 2, axis=0, keepdims=True)
        return (x - m) * jax.lax.rsqrt(v + EPS) * g + b

    img = bn(image_features, params["norm0_weight"], params["norm0_bias"])
    aud = bn(audio_features, params["norm0_weight"], params["norm0_bias"])
    cat = jnp.concatenate([img, aud], axis=1)
    return bn(cat, params["norm_weight"], params["norm_bias"])


if __name__ == "__main__":
    key = jax.random.PRNGKey(0)
    k1, k2 = jax.random.split(key)
    B = 8  # small batch; feature dims fixed by the module (1024 per modality)
    image_features = jax.random.normal(k1, (B, 1024), jnp.float32) * 2.0 + 0.5
    audio_features = jax.random.normal(k2, (B, 1024), jnp.float32) * 3.0 - 1.0

    params = init_params()

    out = fusion_model_forward(image_features, audio_features, params)
    out = jax.block_until_ready(out)

    ref = _reference(image_features, audio_features, params)
    assert out.shape == (B, 2048)
    assert jnp.allclose(out, ref, atol=1e-4, rtol=1e-4), "mismatch vs reference"

    print("KERNEL_OK")
</pallas_src>

<mosaic_0001>
module attributes {stable_mosaic.version = 11 : i64} {
  func.func @_fusion_bn_kernel(%arg0: memref<8x1024xf32, #tpu.memory_space<vmem>>, %arg1: memref<8x1024xf32, #tpu.memory_space<vmem>>, %arg2: memref<1x5120xf32, #tpu.memory_space<vmem>>, %arg3: memref<8x2048xf32, #tpu.memory_space<vmem>>) attributes {dimension_semantics = [], scalar_prefetch = 0 : i64, scratch_operands = 0 : i64, tpu.core_type = #tpu.core_type<tc>} {
    %c0 = arith.constant 0 : index
    %c0_0 = arith.constant 0 : index
    %0 = vector.load %arg2[%c0, %c0_0] : memref<1x5120xf32, #tpu.memory_space<vmem>>, vector<1x1024xf32>
    %c0_1 = arith.constant 0 : index
    %c1024 = arith.constant 1024 : index
    %1 = vector.load %arg2[%c0_1, %c1024] : memref<1x5120xf32, #tpu.memory_space<vmem>>, vector<1x2048xf32>
    %c0_2 = arith.constant 0 : index
    %c3072 = arith.constant 3072 : index
    %2 = vector.load %arg2[%c0_2, %c3072] : memref<1x5120xf32, #tpu.memory_space<vmem>>, vector<1x2048xf32>
    %3 = arith.mulf %0, %0 : vector<1x1024xf32>
    %cst = arith.constant 9.99999974E-6 : f32
    %4 = vector.broadcast %cst : f32 to vector<1x1024xf32>
    %5 = arith.addf %3, %4 : vector<1x1024xf32>
    %c0_3 = arith.constant 0 : index
    %c0_4 = arith.constant 0 : index
    %6 = vector.load %arg0[%c0_3, %c0_4] : memref<8x1024xf32, #tpu.memory_space<vmem>>, vector<8x1024xf32>
    %7 = vector.extract_strided_slice %1 {offsets = [0, 0], sizes = [1, 1024], strides = [1, 1]} : vector<1x2048xf32> to vector<1x1024xf32>
    %8 = vector.extract_strided_slice %2 {offsets = [0, 0], sizes = [1, 1024], strides = [1, 1]} : vector<1x2048xf32> to vector<1x1024xf32>
    %cst_5 = arith.constant dense<0.000000e+00> : vector<1024xf32>
    %9 = vector.multi_reduction <add>, %6, %cst_5 [0] : vector<8x1024xf32> to vector<1024xf32>
    %10 = vector.shape_cast %9 : vector<1024xf32> to vector<1x1024xf32>
    %cst_6 = arith.constant 8.000000e+00 : f32
    %11 = vector.broadcast %cst_6 : f32 to vector<1x1024xf32>
    %12 = arith.divf %10, %11 : vector<1x1024xf32>
    %13 = vector.broadcast %12 : vector<1x1024xf32> to vector<8x1024xf32>
    %14 = arith.subf %6, %13 : vector<8x1024xf32>
    %15 = arith.mulf %14, %14 : vector<8x1024xf32>
    %cst_7 = arith.constant dense<0.000000e+00> : vector<1024xf32>
    %16 = vector.multi_reduction <add>, %15, %cst_7 [0] : vector<8x1024xf32> to vector<1024xf32>
    %17 = vector.shape_cast %16 : vector<1024xf32> to vector<1x1024xf32>
    %cst_8 = arith.constant 8.000000e+00 : f32
    %18 = vector.broadcast %cst_8 : f32 to vector<1x1024xf32>
    %19 = arith.divf %17, %18 : vector<1x1024xf32>
    %20 = arith.mulf %7, %0 : vector<1x1024xf32>
    %21 = arith.mulf %5, %19 : vector<1x1024xf32>
    %cst_9 = arith.constant 1.000000e-10 : f32
    %22 = vector.broadcast %cst_9 : f32 to vector<1x1024xf32>
    %23 = arith.addf %21, %22 : vector<1x1024xf32>
    %24 = math.rsqrt %23 : vector<1x1024xf32>
    %25 = arith.mulf %20, %24 : vector<1x1024xf32>
    %26 = vector.broadcast %25 : vector<1x1024xf32> to vector<8x1024xf32>
    %27 = arith.mulf %14, %26 : vector<8x1024xf32>
    %28 = vector.broadcast %8 : vector<1x1024xf32> to vector<8x1024xf32>
    %29 = arith.addf %27, %28 : vector<8x1024xf32>
    %c0_10 = arith.constant 0 : index
    %c0_11 = arith.constant 0 : index
    %30 = vector.load %arg3[%c0_10, %c0_11] : memref<8x2048xf32, #tpu.memory_space<vmem>>, vector<8x1024xf32>
    tpu.vector_store %arg3[%c0_10, %c0_11], %29 {strides = array<i32>} : memref<8x2048xf32, #tpu.memory_space<vmem>>, vector<8x1024xf32>,
    %c0_12 = arith.constant 0 : index
    %c0_13 = arith.constant 0 : index
    %31 = vector.load %arg1[%c0_12, %c0_13] : memref<8x1024xf32, #tpu.memory_space<vmem>>, vector<8x1024xf32>
    %32 = vector.extract_strided_slice %1 {offsets = [0, 1024], sizes = [1, 1024], strides = [1, 1]} : vector<1x2048xf32> to vector<1x1024xf32>
    %33 = vector.extract_strided_slice %2 {offsets = [0, 1024], sizes = [1, 1024], strides = [1, 1]} : vector<1x2048xf32> to vector<1x1024xf32>
    %cst_14 = arith.constant dense<0.000000e+00> : vector<1024xf32>
    %34 = vector.multi_reduction <add>, %31, %cst_14 [0] : vector<8x1024xf32> to vector<1024xf32>
    %35 = vector.shape_cast %34 : vector<1024xf32> to vector<1x1024xf32>
    %cst_15 = arith.constant 8.000000e+00 : f32
    %36 = vector.broadcast %cst_15 : f32 to vector<1x1024xf32>
    %37 = arith.divf %35, %36 : vector<1x1024xf32>
    %38 = vector.broadcast %37 : vector<1x1024xf32> to vector<8x1024xf32>
    %39 = arith.subf %31, %38 : vector<8x1024xf32>
    %40 = arith.mulf %39, %39 : vector<8x1024xf32>
    %cst_16 = arith.constant dense<0.000000e+00> : vector<1024xf32>
    %41 = vector.multi_reduction <add>, %40, %cst_16 [0] : vector<8x1024xf32> to vector<1024xf32>
    %42 = vector.shape_cast %41 : vector<1024xf32> to vector<1x1024xf32>
    %cst_17 = arith.constant 8.000000e+00 : f32
    %43 = vector.broadcast %cst_17 : f32 to vector<1x1024xf32>
    %44 = arith.divf %42, %43 : vector<1x1024xf32>
    %45 = arith.mulf %32, %0 : vector<1x1024xf32>
    %46 = arith.mulf %5, %44 : vector<1x1024xf32>
    %cst_18 = arith.constant 1.000000e-10 : f32
    %47 = vector.broadcast %cst_18 : f32 to vector<1x1024xf32>
    %48 = arith.addf %46, %47 : vector<1x1024xf32>
    %49 = math.rsqrt %48 : vector<1x1024xf32>
    %50 = arith.mulf %45, %49 : vector<1x1024xf32>
    %51 = vector.broadcast %50 : vector<1x1024xf32> to vector<8x1024xf32>
    %52 = arith.mulf %39, %51 : vector<8x1024xf32>
    %53 = vector.broadcast %33 : vector<1x1024xf32> to vector<8x1024xf32>
    %54 = arith.addf %52, %53 : vector<8x1024xf32>
    %c0_19 = arith.constant 0 : index
    %c1024_20 = arith.constant 1024 : index
    %55 = vector.load %arg3[%c0_19, %c1024_20] : memref<8x2048xf32, #tpu.memory_space<vmem>>, vector<8x1024xf32>
    tpu.vector_store %arg3[%c0_19, %c1024_20], %54 {strides = array<i32>} : memref<8x2048xf32, #tpu.memory_space<vmem>>, vector<8x1024xf32>,
    return
  }
}

</mosaic_0001>

<llo_original>
// kernel: tpu_custom_call.1
$region0: #{tpu_custom_call.1}
  #allocation0 [shape = 'u32[]', space=smem, size = 0x4, offset = 0x4, fixed_abs, tag = 'smem constant byte address 0x4 - core index']
  #allocation1 [shape = 'u32[72,128]{1,0:T(1,128)}', space=vmem, size = 0x9000, scoped, tag = 'internal scratch']
  %s0 = inlined_call_operand.hbm [shape: f32[8,1024], index: 0, kind: input, shape index: {}]
  %s1 = inlined_call_operand.hbm [shape: f32[8,1024], index: 1, kind: input, shape index: {}]
  %s2 = inlined_call_operand.hbm [shape: f32[1,5120], index: 2, kind: input, shape index: {}]
  %s3 = inlined_call_operand.hbm [shape: f32[8,2048], index: 3, kind: output, shape index: {}]
  %s4 = sld [smem:[#allocation0]]
  $region34: #{tpu_custom_call.1} parent=0
    _
  %s6 = ssub.s32 1, %s4
  %s7 = scalar_select 0, %s6, %s4
  $region1: #{tpu_custom_call.1} parent=0
    #allocation2 [shape = 'u8[32768]{0}', space=vmem, size = 0x8000, scoped, tag = 'input window, operand 0, single buffered']
    #allocation3 [shape = 's32[1]{0}', space=sflag, size = 0x4, scoped, tag = 'scoped memory for tpu_custom_call.1']
    #allocation4 [shape = 's32[1]{0}', space=sflag, size = 0x4, scoped, tag = 'scoped memory for tpu_custom_call.1']
    #allocation5 [shape = 'u8[32768]{0}', space=vmem, size = 0x8000, scoped, tag = 'input window, operand 1, single buffered']
    #allocation6 [shape = 's32[1]{0}', space=sflag, size = 0x4, scoped, tag = 'scoped memory for tpu_custom_call.1']
    #allocation7 [shape = 'u8[20480]{0}', space=vmem, size = 0x5000, scoped, tag = 'input window, operand 2, single buffered']
    #allocation8 [shape = 'u8[65536]{0}', space=vmem, size = 0x10000, scoped, tag = 'output window, operand 0, single buffered']
    %8 = vsyncpa [#allocation3], 0
    %9 = vsyncpa [#allocation6], 0
    %10 = vsyncpa [#allocation4], 0
    // Predicated region
    $region2: #{tpu_custom_call.1} parent=1 // pred_check
      _
    $region3: #{tpu_custom_call.1} parent=1 // pred_check_branch
      %12 = sbr.rel (0) target = $region5
    $region4: #{tpu_custom_call.1} parent=1 // pred_region
      %14 = vsyncadd [#allocation3], 0
      %s16 = sshll.u32 %s0, 4
      %s17 = int_to_ptr.hbm [resolvable:$true] %s16
      %s18 = sshll.u32 [#allocation2], 4
      %s19 = int_to_ptr.vmem [resolvable:$true] %s18
      %21 = dma.hbm_to_vmem [thread:$0]  %s17, 1024, %s19, [#allocation3]
    $region5: #{tpu_custom_call.1} parent=1 // pred_fallthru
      _
    // Predicated region
    $region6: #{tpu_custom_call.1} parent=1 // pred_check
      _
    $region7: #{tpu_custom_call.1} parent=1 // pred_check_branch
      %23 = sbr.rel (0) target = $region9
    $region8: #{tpu_custom_call.1} parent=1 // pred_region
      %25 = vsyncadd [#allocation6], 0
      %s27 = sshll.u32 %s1, 4
      %s28 = int_to_ptr.hbm [resolvable:$true] %s27
      %s29 = sshll.u32 [#allocation5], 4
      %s30 = int_to_ptr.vmem [resolvable:$true] %s29
      %32 = dma.hbm_to_vmem [thread:$0]  %s28, 1024, %s30, [#allocation6]
    $region9: #{tpu_custom_call.1} parent=1 // pred_fallthru
      _
    // Predicated region
    $region10: #{tpu_custom_call.1} parent=1 // pred_check
      _
    $region11: #{tpu_custom_call.1} parent=1 // pred_check_branch
      %34 = sbr.rel (0) target = $region13
    $region12: #{tpu_custom_call.1} parent=1 // pred_region
      %36 = vsyncadd [#allocation6], 0
      %s38 = sshll.u32 %s2, 4
      %s39 = int_to_ptr.hbm [resolvable:$true] %s38
      %s40 = sshll.u32 [#allocation7], 4
      %s41 = int_to_ptr.vmem [resolvable:$true] %s40
      %43 = dma.hbm_to_vmem [thread:$0]  %s39, 640, %s41, [#allocation6]
    $region13: #{tpu_custom_call.1} parent=1 // pred_fallthru
      _
    // Predicated region
    $region14: #{tpu_custom_call.1} parent=1 // pred_check
      _
    $region15: #{tpu_custom_call.1} parent=1 // pred_check_branch
      %45 = sbr.rel (0) target = $region17
    $region16: #{tpu_custom_call.1} parent=1 // pred_region
      %47 = dma.done [#allocation3], 1024
    $region17: #{tpu_custom_call.1} parent=1 // pred_fallthru
      _
    // Predicated region
    $region18: #{tpu_custom_call.1} parent=1 // pred_check
      _
    $region19: #{tpu_custom_call.1} parent=1 // pred_check_branch
      %49 = sbr.rel (0) target = $region21
    $region20: #{tpu_custom_call.1} parent=1 // pred_region
      %51 = dma.done [#allocation6], 1024
    $region21: #{tpu_custom_call.1} parent=1 // pred_fallthru
      _
    // Predicated region
    $region22: #{tpu_custom_call.1} parent=1 // pred_check
      _
    $region23: #{tpu_custom_call.1} parent=1 // pred_check_branch
      %53 = sbr.rel (0) target = $region25
    $region24: #{tpu_custom_call.1} parent=1 // pred_region
      %55 = dma.done [#allocation6], 640
    $region25: #{tpu_custom_call.1} parent=1 // pred_fallthru
      _
    %v56 = vld [vmem:[#allocation7] sm:$0xff]
    %v57 = vld [vmem:[#allocation7 + $0x8] sm:$0xff]
    %v58 = vld [vmem:[#allocation7 + $0x10] sm:$0xff]
    %v59 = vld [vmem:[#allocation7 + $0x18] sm:$0xff]
    %v60 = vld [vmem:[#allocation7 + $0x20] sm:$0xff]
    %v61 = vmul.f32 %v56, %v56
    %v62 = vadd.f32 %v61, 1e-05
    %v63 = vld [vmem:[#allocation2] sm:$0xff]
    %v64 = vld [vmem:[#allocation2 + $0x8] sm:$0xff]
    %v65 = vld [vmem:[#allocation2 + $0x10] sm:$0xff]
    %v66 = vld [vmem:[#allocation2 + $0x18] sm:$0xff]
    %v67 = vld [vmem:[#allocation2 + $0x20] sm:$0xff]
    %v68 = vld [vmem:[#allocation2 + $0x28] sm:$0xff]
    %v69 = vld [vmem:[#allocation2 + $0x30] sm:$0xff]
    %v70 = vld [vmem:[#allocation2 + $0x38] sm:$0xff]
    %v71 = vrot.slane %v63, 4
    %v72 = vadd.f32 %v63, %v71
    %v73 = vrot.slane %v72, 2
    %v74 = vadd.f32 %v72, %v73
    %v75 = vrot.slane %v74, 1
    %v76 = vadd.f32 %v74, %v75
    %v77 = vrot.slane %v64, 4
    %v78 = vadd.f32 %v64, %v77
    %v79 = vrot.slane %v78, 2
    %v80 = vadd.f32 %v78, %v79
    %v81 = vrot.slane %v80, 1
    %v82 = vadd.f32 %v80, %v81
    %v83 = vrot.slane %v65, 4
    %v84 = vadd.f32 %v65, %v83
    %v85 = vrot.slane %v84, 2
    %v86 = vadd.f32 %v84, %v85
    %v87 = vrot.slane %v86, 1
    %v88 = vadd.f32 %v86, %v87
    %v89 = vrot.slane %v66, 4
    %v90 = vadd.f32 %v66, %v89
    %v91 = vrot.slane %v90, 2
    %v92 = vadd.f32 %v90, %v91
    %v93 = vrot.slane %v92, 1
    %v94 = vadd.f32 %v92, %v93
    %v95 = vrot.slane %v67, 4
    %v96 = vadd.f32 %v67, %v95
    %v97 = vrot.slane %v96, 2
    %v98 = vadd.f32 %v96, %v97
    %v99 = vrot.slane %v98, 1
    %v100 = vadd.f32 %v98, %v99
    %v101 = vrot.slane %v68, 4
    %v102 = vadd.f32 %v68, %v101
    %v103 = vrot.slane %v102, 2
    %v104 = vadd.f32 %v102, %v103
    %v105 = vrot.slane %v104, 1
    %v106 = vadd.f32 %v104, %v105
    %v107 = vrot.slane %v69, 4
    %v108 = vadd.f32 %v69, %v107
    %v109 = vrot.slane %v108, 2
    %v110 = vadd.f32 %v108, %v109
    %v111 = vrot.slane %v110, 1
    %v112 = vadd.f32 %v110, %v111
    %v113 = vrot.slane %v70, 4
    %v114 = vadd.f32 %v70, %v113
    %v115 = vrot.slane %v114, 2
    %v116 = vadd.f32 %v114, %v115
    %v117 = vrot.slane %v116, 1
    %v118 = vadd.f32 %v116, %v117
    %v119 = vrcp.pop 8.0
    %v120 = vmul.f32 8.0, %v119
    %v121 = vsub.f32 1.0, %v120
    %v122 = vmul.f32 %v119, %v121
    %v123 = vadd.f32 %v119, %v122
    %vm124 = vweird.f32 %v119
    %v125 = vsel %vm124, %v119, %v123
    %v126 = vmul.f32 %v76, %v125
    %v127 = vmul.f32 %v82, %v125
    %v128 = vmul.f32 %v88, %v125
    %v129 = vmul.f32 %v94, %v125
    %v130 = vmul.f32 %v100, %v125
    %v131 = vmul.f32 %v106, %v125
    %v132 = vmul.f32 %v112, %v125
    %v133 = vmul.f32 %v118, %v125
    %v134 = vsub.f32 %v63, %v126
    %v135 = vsub.f32 %v64, %v127
    %v136 = vsub.f32 %v65, %v128
    %v137 = vsub.f32 %v66, %v129
    %v138 = vsub.f32 %v67, %v130
    %v139 = vsub.f32 %v68, %v131
    %v140 = vsub.f32 %v69, %v132
    %v141 = vsub.f32 %v70, %v133
    %v142 = vmul.f32 %v134, %v134
    %v143 = vmul.f32 %v135, %v135
    %v144 = vmul.f32 %v136, %v136
    %v145 = vmul.f32 %v137, %v137
    %v146 = vmul.f32 %v138, %v138
    %v147 = vmul.f32 %v139, %v139
    %v148 = vmul.f32 %v140, %v140
    %v149 = vmul.f32 %v141, %v141
    %v150 = vrot.slane %v142, 4
    %v151 = vadd.f32 %v142, %v150
    %v152 = vrot.slane %v151, 2
    %v153 = vadd.f32 %v151, %v152
    %v154 = vrot.slane %v153, 1
    %v155 = vadd.f32 %v153, %v154
    %v156 = vrot.slane %v143, 4
    %v157 = vadd.f32 %v143, %v156
    %v158 = vrot.slane %v157, 2
    %v159 = vadd.f32 %v157, %v158
    %v160 = vrot.slane %v159, 1
    %v161 = vadd.f32 %v159, %v160
    %v162 = vrot.slane %v144, 4
    %v163 = vadd.f32 %v144, %v162
    %v164 = vrot.slane %v163, 2
    %v165 = vadd.f32 %v163, %v164
    %v166 = vrot.slane %v165, 1
    %v167 = vadd.f32 %v165, %v166
    %v168 = vrot.slane %v145, 4
    %v169 = vadd.f32 %v145, %v168
    %v170 = vrot.slane %v169, 2
    %v171 = vadd.f32 %v169, %v170
    %v172 = vrot.slane %v171, 1
    %v173 = vadd.f32 %v171, %v172
    %v174 = vrot.slane %v146, 4
    %v175 = vadd.f32 %v146, %v174
    %v176 = vrot.slane %v175, 2
    %v177 = vadd.f32 %v175, %v176
    %v178 = vrot.slane %v177, 1
    %v179 = vadd.f32 %v177, %v178
    %v180 = vrot.slane %v147, 4
    %v181 = vadd.f32 %v147, %v180
    %v182 = vrot.slane %v181, 2
    %v183 = vadd.f32 %v181, %v182
    %v184 = vrot.slane %v183, 1
    %v185 = vadd.f32 %v183, %v184
    %v186 = vrot.slane %v148, 4
    %v187 = vadd.f32 %v148, %v186
    %v188 = vrot.slane %v187, 2
    %v189 = vadd.f32 %v187, %v188
    %v190 = vrot.slane %v189, 1
    %v191 = vadd.f32 %v189, %v190
    %v192 = vrot.slane %v149, 4
    %v193 = vadd.f32 %v149, %v192
    %v194 = vrot.slane %v193, 2
    %v195 = vadd.f32 %v193, %v194
    %v196 = vrot.slane %v195, 1
    %v197 = vadd.f32 %v195, %v196
    %v198 = vmul.f32 %v155, %v125
    %v199 = vmul.f32 %v161, %v125
    %v200 = vmul.f32 %v167, %v125
    %v201 = vmul.f32 %v173, %v125
    %v202 = vmul.f32 %v179, %v125
    %v203 = vmul.f32 %v185, %v125
    %v204 = vmul.f32 %v191, %v125
    %v205 = vmul.f32 %v197, %v125
    %v206 = vmul.f32 %v57, %v56
    %v215 = vrot.slane %v199, 7
    %v216 = vrot.slane %v200, 6
    %v217 = vrot.slane %v201, 5
    %v218 = vrot.slane %v202, 4
    %v219 = vrot.slane %v203, 3
    %v220 = vrot.slane %v204, 2
    %v221 = vrot.slane %v205, 1
    %vm222 = vcmask 1040384
    %v223 = vsel %vm222, %v198, %v215
    %vm224 = vcmask 1042434
    %v225 = vsel %vm224, %v216, %v217
    %vm226 = vcmask 1041408
    %v227 = vsel %vm226, %v223, %v225
    %vm228 = vcmask 1044484
    %v229 = vsel %vm228, %v218, %v219
    %vm230 = vcmask 1046534
    %v231 = vsel %vm230, %v220, %v221
    %vm232 = vcmask 1045508
    %v233 = vsel %vm232, %v229, %v231
    %vm234 = vcmask 1043456
    %v235 = vsel %vm234, %v227, %v233
    %v237 = vmul.f32 %v62, %v235
    %v238 = vadd.f32 %v237, 1e-10
    %v239 = vrsqrt.pop %v238
    %v240 = vmul.f32 %v239, %v238
    %v241 = vmul.f32 %v240, %v239
    %v242 = vmul.f32 0.5, %v241
    %v243 = vsub.f32 1.5, %v242
    %v244 = vmul.f32 %v239, %v243
    %vm245 = vweird.f32 %v238
    %vm246 = vweird.f32 %v239
    %vm247 = vmor %vm245, %vm246
    %v248 = vsel %vm247, %v239, %v244
    %v249 = vmul.f32 %v206, %v248
    %v251 = vperm.slane %v249, 0
    %v252 = vperm.slane %v249, 1
    %v253 = vperm.slane %v249, 2
    %v254 = vperm.slane %v249, 3
    %v255 = vperm.slane %v249, 4
    %v256 = vperm.slane %v249, 5
    %v257 = vperm.slane %v249, 6
    %v258 = vperm.slane %v249, 7
    %v267 = vmul.f32 %v134, %v251
    %v268 = vmul.f32 %v135, %v252
    %v269 = vmul.f32 %v136, %v253
    %v270 = vmul.f32 %v137, %v254
    %v271 = vmul.f32 %v138, %v255
    %v272 = vmul.f32 %v139, %v256
    %v273 = vmul.f32 %v140, %v257
    %v274 = vmul.f32 %v141, %v258
    %v276 = vperm.slane %v59, 0
    %v277 = vperm.slane %v59, 1
    %v278 = vperm.slane %v59, 2
    %v279 = vperm.slane %v59, 3
    %v280 = vperm.slane %v59, 4
    %v281 = vperm.slane %v59, 5
    %v282 = vperm.slane %v59, 6
    %v283 = vperm.slane %v59, 7
    %v292 = vadd.f32 %v267, %v276
    %v293 = vadd.f32 %v268, %v277
    %v294 = vadd.f32 %v269, %v278
    %v295 = vadd.f32 %v270, %v279
    %v296 = vadd.f32 %v271, %v280
    %v297 = vadd.f32 %v272, %v281
    %v298 = vadd.f32 %v273, %v282
    %v299 = vadd.f32 %v274, %v283
    %300 = vst [vmem:[#allocation8] sm:$0xff] %v292
    %301 = vst [vmem:[#allocation8 + $0x8] sm:$0xff] %v293
    %302 = vst [vmem:[#allocation8 + $0x10] sm:$0xff] %v294
    %303 = vst [vmem:[#allocation8 + $0x18] sm:$0xff] %v295
    %304 = vst [vmem:[#allocation8 + $0x20] sm:$0xff] %v296
    %305 = vst [vmem:[#allocation8 + $0x28] sm:$0xff] %v297
    %306 = vst [vmem:[#allocation8 + $0x30] sm:$0xff] %v298
    %307 = vst [vmem:[#allocation8 + $0x38] sm:$0xff] %v299
    %v308 = vld [vmem:[#allocation5] sm:$0xff]
    %v309 = vld [vmem:[#allocation5 + $0x8] sm:$0xff]
    %v310 = vld [vmem:[#allocation5 + $0x10] sm:$0xff]
    %v311 = vld [vmem:[#allocation5 + $0x18] sm:$0xff]
    %v312 = vld [vmem:[#allocation5 + $0x20] sm:$0xff]
    %v313 = vld [vmem:[#allocation5 + $0x28] sm:$0xff]
    %v314 = vld [vmem:[#allocation5 + $0x30] sm:$0xff]
    %v315 = vld [vmem:[#allocation5 + $0x38] sm:$0xff]
    %v316 = vrot.slane %v308, 4
    %v317 = vadd.f32 %v308, %v316
    %v318 = vrot.slane %v317, 2
    %v319 = vadd.f32 %v317, %v318
    %v320 = vrot.slane %v319, 1
    %v321 = vadd.f32 %v319, %v320
    %v322 = vrot.slane %v309, 4
    %v323 = vadd.f32 %v309, %v322
    %v324 = vrot.slane %v323, 2
    %v325 = vadd.f32 %v323, %v324
    %v326 = vrot.slane %v325, 1
    %v327 = vadd.f32 %v325, %v326
    %v328 = vrot.slane %v310, 4
    %v329 = vadd.f32 %v310, %v328
    %v330 = vrot.slane %v329, 2
    %v331 = vadd.f32 %v329, %v330
    %v332 = vrot.slane %v331, 1
    %v333 = vadd.f32 %v331, %v332
    %v334 = vrot.slane %v311, 4
    %v335 = vadd.f32 %v311, %v334
    %v336 = vrot.slane %v335, 2
    %v337 = vadd.f32 %v335, %v336
    %v338 = vrot.slane %v337, 1
    %v339 = vadd.f32 %v337, %v338
    %v340 = vrot.slane %v312, 4
    %v341 = vadd.f32 %v312, %v340
    %v342 = vrot.slane %v341, 2
    %v343 = vadd.f32 %v341, %v342
    %v344 = vrot.slane %v343, 1
    %v345 = vadd.f32 %v343, %v344
    %v346 = vrot.slane %v313, 4
    %v347 = vadd.f32 %v313, %v346
    %v348 = vrot.slane %v347, 2
    %v349 = vadd.f32 %v347, %v348
    %v350 = vrot.slane %v349, 1
    %v351 = vadd.f32 %v349, %v350
    %v352 = vrot.slane %v314, 4
    %v353 = vadd.f32 %v314, %v352
    %v354 = vrot.slane %v353, 2
    %v355 = vadd.f32 %v353, %v354
    %v356 = vrot.slane %v355, 1
    %v357 = vadd.f32 %v355, %v356
    %v358 = vrot.slane %v315, 4
    %v359 = vadd.f32 %v315, %v358
    %v360 = vrot.slane %v359, 2
    %v361 = vadd.f32 %v359, %v360
    %v362 = vrot.slane %v361, 1
    %v363 = vadd.f32 %v361, %v362
    %v364 = vmul.f32 %v321, %v125
    %v365 = vmul.f32 %v327, %v125
    %v366 = vmul.f32 %v333, %v125
    %v367 = vmul.f32 %v339, %v125
    %v368 = vmul.f32 %v345, %v125
    %v369 = vmul.f32 %v351, %v125
    %v370 = vmul.f32 %v357, %v125
    %v371 = vmul.f32 %v363, %v125
    %v372 = vsub.f32 %v308, %v364
    %v373 = vsub.f32 %v309, %v365
    %v374 = vsub.f32 %v310, %v366
    %v375 = vsub.f32 %v311, %v367
    %v376 = vsub.f32 %v312, %v368
    %v377 = vsub.f32 %v313, %v369
    %v378 = vsub.f32 %v314, %v370
    %v379 = vsub.f32 %v315, %v371
    %v380 = vmul.f32 %v372, %v372
    %v381 = vmul.f32 %v373, %v373
    %v382 = vmul.f32 %v374, %v374
    %v383 = vmul.f32 %v375, %v375
    %v384 = vmul.f32 %v376, %v376
    %v385 = vmul.f32 %v377, %v377
    %v386 = vmul.f32 %v378, %v378
    %v387 = vmul.f32 %v379, %v379
    %v388 = vrot.slane %v380, 4
    %v389 = vadd.f32 %v380, %v388
    %v390 = vrot.slane %v389, 2
    %v391 = vadd.f32 %v389, %v390
    %v392 = vrot.slane %v391, 1
    %v393 = vadd.f32 %v391, %v392
    %v394 = vrot.slane %v381, 4
    %v395 = vadd.f32 %v381, %v394
    %v396 = vrot.slane %v395, 2
    %v397 = vadd.f32 %v395, %v396
    %v398 = vrot.slane %v397, 1
    %v399 = vadd.f32 %v397, %v398
    %v400 = vrot.slane %v382, 4
    %v401 = vadd.f32 %v382, %v400
    %v402 = vrot.slane %v401, 2
    %v403 = vadd.f32 %v401, %v402
    %v404 = vrot.slane %v403, 1
    %v405 = vadd.f32 %v403, %v404
    %v406 = vrot.slane %v383, 4
    %v407 = vadd.f32 %v383, %v406
    %v408 = vrot.slane %v407, 2
    %v409 = vadd.f32 %v407, %v408
    %v410 = vrot.slane %v409, 1
    %v411 = vadd.f32 %v409, %v410
    %v412 = vrot.slane %v384, 4
    %v413 = vadd.f32 %v384, %v412
    %v414 = vrot.slane %v413, 2
    %v415 = vadd.f32 %v413, %v414
    %v416 = vrot.slane %v415, 1
    %v417 = vadd.f32 %v415, %v416
    %v418 = vrot.slane %v385, 4
    %v419 = vadd.f32 %v385, %v418
    %v420 = vrot.slane %v419, 2
    %v421 = vadd.f32 %v419, %v420
    %v422 = vrot.slane %v421, 1
    %v423 = vadd.f32 %v421, %v422
    %v424 = vrot.slane %v386, 4
    %v425 = vadd.f32 %v386, %v424
    %v426 = vrot.slane %v425, 2
    %v427 = vadd.f32 %v425, %v426
    %v428 = vrot.slane %v427, 1
    %v429 = vadd.f32 %v427, %v428
    %v430 = vrot.slane %v387, 4
    %v431 = vadd.f32 %v387, %v430
    %v432 = vrot.slane %v431, 2
    %v433 = vadd.f32 %v431, %v432
    %v434 = vrot.slane %v433, 1
    %v435 = vadd.f32 %v433, %v434
    %v436 = vmul.f32 %v393, %v125
    %v437 = vmul.f32 %v399, %v125
    %v438 = vmul.f32 %v405, %v125
    %v439 = vmul.f32 %v411, %v125
    %v440 = vmul.f32 %v417, %v125
    %v441 = vmul.f32 %v423, %v125
    %v442 = vmul.f32 %v429, %v125
    %v443 = vmul.f32 %v435, %v125
    %v444 = vmul.f32 %v58, %v56
    %v453 = vrot.slane %v437, 7
    %v454 = vrot.slane %v438, 6
    %v455 = vrot.slane %v439, 5
    %v456 = vrot.slane %v440, 4
    %v457 = vrot.slane %v441, 3
    %v458 = vrot.slane %v442, 2
    %v459 = vrot.slane %v443, 1
    %v460 = vsel %vm222, %v436, %v453
    %v461 = vsel %vm224, %v454, %v455
    %v462 = vsel %vm226, %v460, %v461
    %v463 = vsel %vm228, %v456, %v457
    %v464 = vsel %vm230, %v458, %v459
    %v465 = vsel %vm232, %v463, %v464
    %v466 = vsel %vm234, %v462, %v465
    %v468 = vmul.f32 %v62, %v466
    %v469 = vadd.f32 %v468, 1e-10
    %v470 = vrsqrt.pop %v469
    %v471 = vmul.f32 %v470, %v469
    %v472 = vmul.f32 %v471, %v470
    %v473 = vmul.f32 0.5, %v472
    %v474 = vsub.f32 1.5, %v473
    %v475 = vmul.f32 %v470, %v474
    %vm476 = vweird.f32 %v469
    %vm477 = vweird.f32 %v470
    %vm478 = vmor %vm476, %vm477
    %v479 = vsel %vm478, %v470, %v475
    %v480 = vmul.f32 %v444, %v479
    %v482 = vperm.slane %v480, 0
    %v483 = vperm.slane %v480, 1
    %v484 = vperm.slane %v480, 2
    %v485 = vperm.slane %v480, 3
    %v486 = vperm.slane %v480, 4
    %v487 = vperm.slane %v480, 5
    %v488 = vperm.slane %v480, 6
    %v489 = vperm.slane %v480, 7
    %v498 = vmul.f32 %v372, %v482
    %v499 = vmul.f32 %v373, %v483
    %v500 = vmul.f32 %v374, %v484
    %v501 = vmul.f32 %v375, %v485
    %v502 = vmul.f32 %v376, %v486
    %v503 = vmul.f32 %v377, %v487
    %v504 = vmul.f32 %v378, %v488
    %v505 = vmul.f32 %v379, %v489
    %v507 = vperm.slane %v60, 0
    %v508 = vperm.slane %v60, 1
    %v509 = vperm.slane %v60, 2
    %v510 = vperm.slane %v60, 3
    %v511 = vperm.slane %v60, 4
    %v512 = vperm.slane %v60, 5
    %v513 = vperm.slane %v60, 6
    %v514 = vperm.slane %v60, 7
    %v523 = vadd.f32 %v498, %v507
    %v524 = vadd.f32 %v499, %v508
    %v525 = vadd.f32 %v500, %v509
    %v526 = vadd.f32 %v501, %v510
    %v527 = vadd.f32 %v502, %v511
    %v528 = vadd.f32 %v503, %v512
    %v529 = vadd.f32 %v504, %v513
    %v530 = vadd.f32 %v505, %v514
    %531 = vst [vmem:[#allocation8 + $0x40] sm:$0xff] %v523
    %532 = vst [vmem:[#allocation8 + $0x48] sm:$0xff] %v524
    %533 = vst [vmem:[#allocation8 + $0x50] sm:$0xff] %v525
    %534 = vst [vmem:[#allocation8 + $0x58] sm:$0xff] %v526
    %535 = vst [vmem:[#allocation8 + $0x60] sm:$0xff] %v527
    %536 = vst [vmem:[#allocation8 + $0x68] sm:$0xff] %v528
    %537 = vst [vmem:[#allocation8 + $0x70] sm:$0xff] %v529
    %538 = vst [vmem:[#allocation8 + $0x78] sm:$0xff] %v530
    // Predicated region
    $region26: #{tpu_custom_call.1} parent=1 // pred_check
      _
    $region27: #{tpu_custom_call.1} parent=1 // pred_check_branch
      %540 = sbr.rel (0) target = $region29
    $region28: #{tpu_custom_call.1} parent=1 // pred_region
      %542 = vsyncadd [#allocation4], 0
      %s544 = sshll.u32 [#allocation8], 4
      %s545 = int_to_ptr.vmem [resolvable:$true] %s544
      %s546 = sshll.u32 %s3, 4
      %s547 = int_to_ptr.hbm [resolvable:$true] %s546
      %549 = dma.vmem_to_hbm [thread:$0]  %s545, 2048, %s547, [#allocation4]
    $region29: #{tpu_custom_call.1} parent=1 // pred_fallthru
      _
    // Predicated region
    $region30: #{tpu_custom_call.1} parent=1 // pred_check
      _
    $region31: #{tpu_custom_call.1} parent=1 // pred_check_branch
      %551 = sbr.rel (0) target = $region33
    $region32: #{tpu_custom_call.1} parent=1 // pred_region
      %553 = dma.done [#allocation4], 2048
    $region33: #{tpu_custom_call.1} parent=1 // pred_fallthru
      _
    %554 = vsyncpa [#allocation3], 1
    %555 = vsyncpa [#allocation6], 1
    %556 = vsyncpa [#allocation4], 1

</llo_original>
